<compile_context>
chip_gen: v6e
topology: v6e:2x2x1
jax: 0.10.0
libtpu: 0.0.40
codegen_flags: <defaults>
</compile_context>

<pallas_src>
import math
import jax
import jax.numpy as jnp
from jax import lax
from jax.experimental import pallas as pl
from jax.experimental.pallas import tpu as pltpu


def _cdiv(a, b):
    return -(-a // b)


def _round_up(x, m):
    return ((x + m - 1) // m) * m


# ----------------------------------------------------------------------------
# Kernel: full fused forward on one batch tile.
#   mono_ref: (TILE_B, MONO_F)   batch-major input block
#   nm_ref:   (TILE_B, NM_F)     batch-major input block
#   w1m/w1n/b1, w2, w3, w4: fused weights (VMEM-resident, constant per step)
#   out_ref:  (1, TILE_B)        lane-dense output block
# ----------------------------------------------------------------------------
def mlp_relu_dummy_kernel(mono_ref, nm_ref, w1m_ref, w1n_ref, b1_ref,
                          w2_ref, w3_ref, w4_ref, out_ref):
    f32 = jnp.float32
    # Contract the feature (minor) axis of both operands: W (O,F) x act (TB,F)
    # -> (O, TB) feature-major activations, batch on the lane axis.
    dn = (((1,), (1,)), ((), ()))

    # Layer 1: fused mono_fc_in(cat([mono, nm])) + non_mono_fc_in(nm), relu.
    h = (lax.dot_general(w1m_ref[...], mono_ref[...], dn, preferred_element_type=f32)
         + lax.dot_general(w1n_ref[...], nm_ref[...], dn, preferred_element_type=f32)
         + b1_ref[...])
    h = jnp.maximum(h, 0.0)                    # homogeneous ones row: relu(1)=1

    # Layer 2: block-diag(mono_submods_out, non_mono_submods_out), bias folded,
    # hardtanh(0, 1).
    h = jnp.dot(w2_ref[...], h, preferred_element_type=f32)
    h = jnp.clip(h, 0.0, 1.0)                  # clip(1,0,1)=1 keeps ones row

    # Layer 3: fused mono_submods_in(cat([x, y])) + non_mono_submods_in(y), relu.
    h = jnp.dot(w3_ref[...], h, preferred_element_type=f32)
    h = jnp.maximum(h, 0.0)

    # Output head: mono_fc_last(x) + non_mono_fc_last(y) + fused bias column.
    out_ref[...] = jnp.dot(w4_ref[...], h, preferred_element_type=f32)
    # TODO(synk): normalize_regression=True (sigmoid) and compress_non_mono=True
    # branches are not wired; module defaults are False.


# ----------------------------------------------------------------------------
# Parameter construction (deterministic, mimics nn.Linear U(-1/sqrt(fan_in), ..))
# Weights kept in natural PyTorch [out, in] layout; bias [out].
# ----------------------------------------------------------------------------
def make_linear(key, fan_in, fan_out):
    kw, kb = jax.random.split(key)
    bound = 1.0 / math.sqrt(fan_in)
    w = jax.random.uniform(kw, (fan_out, fan_in), jnp.float32, -bound, bound)
    b = jax.random.uniform(kb, (fan_out,), jnp.float32, -bound, bound)
    return w, b


def init_params(key, mono_feature, non_mono_feature,
                mono_hidden_num=5, non_mono_hidden_num=5, bottleneck=10):
    keys = jax.random.split(key, 8)
    p = {}
    p["non_mono_fc_in"] = make_linear(keys[0], non_mono_feature, non_mono_hidden_num)
    p["mono_fc_in"] = make_linear(keys[1], mono_feature + non_mono_feature, mono_hidden_num)
    p["mono_submods_out"] = make_linear(keys[2], mono_hidden_num, bottleneck)
    p["non_mono_submods_out"] = make_linear(keys[3], non_mono_hidden_num, bottleneck)
    p["mono_submods_in"] = make_linear(keys[4], 2 * bottleneck, mono_hidden_num)
    p["non_mono_submods_in"] = make_linear(keys[5], bottleneck, non_mono_hidden_num)
    p["mono_fc_last"] = make_linear(keys[6], mono_hidden_num, 1)
    p["non_mono_fc_last"] = make_linear(keys[7], non_mono_hidden_num, 1)
    return p


# ----------------------------------------------------------------------------
# Wrapper-side weight fusion (tiny arrays; done once, outside the kernel).
# ----------------------------------------------------------------------------
def pack_weights(params, mono_feature, bottleneck=10):
    w_nmin, b_nmin = params["non_mono_fc_in"]         # (NM_H, nm_f)
    w_min, b_min = params["mono_fc_in"]               # (M_H, mono_f + nm_f)
    w_mout, b_mout = params["mono_submods_out"]       # (BN, M_H)
    w_nmout, b_nmout = params["non_mono_submods_out"] # (BN, NM_H)
    w_msin, b_msin = params["mono_submods_in"]        # (M_H, 2*BN)
    w_nmsin, b_nmsin = params["non_mono_submods_in"]  # (NM_H, BN)
    w_ml, b_ml = params["mono_fc_last"]               # (1, M_H)
    w_nml, b_nml = params["non_mono_fc_last"]         # (1, NM_H)

    f32 = jnp.float32
    M_H = w_min.shape[0]
    NM_H = w_nmin.shape[0]
    BN = bottleneck
    nm_f = w_nmin.shape[1]
    H1 = M_H + NM_H + 1          # fused hidden width + homogeneous ones row
    H2 = 2 * BN + 1

    z = lambda r, c: jnp.zeros((r, c), f32)
    one_row = lambda c: jnp.concatenate([z(1, c - 1), jnp.ones((1, 1), f32)], axis=1)

    # Layer 1, split per input so inputs can stay batch-major / un-concatenated.
    w1m = jnp.concatenate([w_min[:, :mono_feature], z(NM_H, mono_feature),
                           z(1, mono_feature)], axis=0)                   # (H1, mono_f)
    w1n = jnp.concatenate([w_min[:, mono_feature:], w_nmin, z(1, nm_f)], axis=0)  # (H1, nm_f)
    b1 = jnp.concatenate([b_min, b_nmin, jnp.ones((1,), f32)]).reshape(H1, 1)

    # Layer 2: block-diagonal + bias column + ones-row carrier.
    w2 = jnp.concatenate([
        jnp.concatenate([w_mout, z(BN, NM_H), b_mout.reshape(BN, 1)], axis=1),
        jnp.concatenate([z(BN, M_H), w_nmout, b_nmout.reshape(BN, 1)], axis=1),
        one_row(H1),
    ], axis=0)                                                             # (H2, H1)

    # Layer 3: mono_submods_in sees cat([x, y]) == h2[:2*BN]; non_mono sees y.
    w3 = jnp.concatenate([
        jnp.concatenate([w_msin, b_msin.reshape(M_H, 1)], axis=1),
        jnp.concatenate([z(NM_H, BN), w_nmsin, b_nmsin.reshape(NM_H, 1)], axis=1),
        one_row(H2),
    ], axis=0)                                                             # (H1, H2)

    # Fused output head (mono_fc_last + non_mono_fc_last, combined bias).
    w4 = jnp.concatenate([w_ml, w_nml, (b_ml + b_nml).reshape(1, 1)], axis=1)  # (1, H1)

    return w1m, w1n, b1, w2, w3, w4


# ----------------------------------------------------------------------------
# Batch tile selection (per perf review).
# ----------------------------------------------------------------------------
def choose_tile_b(B, tile_b_max=16384, min_tiles=2):
    tile_b_max = max(128, _round_up(tile_b_max, 128))
    # Enough tiles to stay under tile_b_max, and at least `min_tiles` when the
    # batch allows it (feeds both TensorCores on v7x; ~0.35us cost elsewhere).
    n_tiles = max(_cdiv(B, tile_b_max), min(min_tiles, _cdiv(B, 128)))
    tile_b = _round_up(_cdiv(B, n_tiles), 128)
    b_pad = _round_up(B, tile_b)
    return tile_b, b_pad


# ----------------------------------------------------------------------------
# Wrapper: batch-tiled, lane-dense pallas_call.
# ----------------------------------------------------------------------------
def mlp_relu_dummy_forward(mono, nm, params, mono_feature, bottleneck=10,
                           tile_b_max=16384):
    B, mono_f = mono.shape
    nm_f = nm.shape[1]

    w1m, w1n, b1, w2, w3, w4 = pack_weights(params, mono_feature, bottleneck)
    H1 = w1m.shape[0]
    H2 = w2.shape[0]

    tile_b, b_pad = choose_tile_b(B, tile_b_max)
    if b_pad != B:
        # Only the (at most tile_b-1) padded rows are extra; they compute finite
        # garbage (relu/clip of bias terms) and are sliced off below.
        mono = jnp.pad(mono, ((0, b_pad - B), (0, 0)))
        nm = jnp.pad(nm, ((0, b_pad - B), (0, 0)))
    grid = (b_pad // tile_b,)

    def const_spec(a):
        # whole-array block, constant index_map -> DMA'd once, VMEM-resident
        return pl.BlockSpec(a.shape, lambda i: (0, 0))

    args = [mono, nm, w1m, w1n, b1, w2, w3, w4]
    in_specs = [
        pl.BlockSpec((tile_b, mono_f), lambda i: (i, 0)),
        pl.BlockSpec((tile_b, nm_f), lambda i: (i, 0)),
    ] + [const_spec(a) for a in args[2:]]
    out_specs = pl.BlockSpec((1, tile_b), lambda i: (0, i))

    # Advisory cost estimate: tiny K/N -> HBM-bandwidth / overhead bound.
    macs_per_row = H1 * mono_f + H1 * nm_f + H2 * H1 + H1 * H2 + H1
    param_bytes = sum(int(a.size) * 4 for a in args[2:])
    cost = pl.CostEstimate(
        flops=2 * macs_per_row * b_pad,
        transcendentals=0,
        bytes_accessed=(mono_f + nm_f + 1) * 4 * b_pad + param_bytes,
    )

    out = pl.pallas_call(
        mlp_relu_dummy_kernel,
        out_shape=jax.ShapeDtypeStruct((1, b_pad), jnp.float32),
        grid=grid,
        in_specs=in_specs,
        out_specs=out_specs,
        compiler_params=pltpu.CompilerParams(
            dimension_semantics=("parallel",),   # shard batch tiles across TCs (v7x)
        ),
        cost_estimate=cost,
    )(*args)

    return out[0, :B].reshape(B, 1)


# ----------------------------------------------------------------------------
# Pure-JAX reference (matches the PyTorch forward)
# ----------------------------------------------------------------------------
def reference_forward(mono, nm, params):
    def lin(x, wb):
        w, b = wb
        return x @ w.T + b

    y = jax.nn.relu(lin(nm, params["non_mono_fc_in"]))
    x = jax.nn.relu(lin(jnp.concatenate([mono, nm], axis=1), params["mono_fc_in"]))
    x = jnp.clip(lin(x, params["mono_submods_out"]), 0.0, 1.0)
    y = jnp.clip(lin(y, params["non_mono_submods_out"]), 0.0, 1.0)
    x = jax.nn.relu(lin(jnp.concatenate([x, y], axis=1), params["mono_submods_in"]))
    y = jax.nn.relu(lin(y, params["non_mono_submods_in"]))
    x = lin(x, params["mono_fc_last"])
    y = lin(y, params["non_mono_fc_last"])
    return x + y


if __name__ == "__main__":
    MONO_F = 4
    NON_MONO_F = 6
    MONO_H = 5
    NON_MONO_H = 5
    BOTTLENECK = 10

    key = jax.random.PRNGKey(0)
    k_mono, k_nm, k_params, k_mono2, k_nm2 = jax.random.split(key, 5)
    params = init_params(k_params, MONO_F, NON_MONO_F, MONO_H, NON_MONO_H, BOTTLENECK)

    # Small single-tile check (B=8 -> one 128-wide tile).
    B = 8
    mono = jax.random.normal(k_mono, (B, MONO_F), jnp.float32)
    nm = jax.random.normal(k_nm, (B, NON_MONO_F), jnp.float32)
    out = jax.block_until_ready(
        mlp_relu_dummy_forward(mono, nm, params, MONO_F, BOTTLENECK))
    ref = reference_forward(mono, nm, params)
    assert out.shape == (B, 1)
    assert jnp.allclose(out, ref, atol=1e-5, rtol=1e-5), (out, ref)

    # Multi-tile check (exercises grid > 1 and the ragged-batch padding path).
    B2 = 300
    mono2 = jax.random.normal(k_mono2, (B2, MONO_F), jnp.float32)
    nm2 = jax.random.normal(k_nm2, (B2, NON_MONO_F), jnp.float32)
    out2 = jax.block_until_ready(
        mlp_relu_dummy_forward(mono2, nm2, params, MONO_F, BOTTLENECK, tile_b_max=128))
    ref2 = reference_forward(mono2, nm2, params)
    assert out2.shape == (B2, 1)
    assert jnp.allclose(out2, ref2, atol=1e-5, rtol=1e-5), (out2, ref2)

    print("KERNEL_OK")
</pallas_src>

<mosaic_0001>
module attributes {stable_mosaic.version = 11 : i64} {
  func.func @mlp_relu_dummy_kernel(%arg0: i32, %arg1: memref<128x4xf32, #tpu.memory_space<vmem>>, %arg2: memref<128x6xf32, #tpu.memory_space<vmem>>, %arg3: memref<11x4xf32, #tpu.memory_space<vmem>>, %arg4: memref<11x6xf32, #tpu.memory_space<vmem>>, %arg5: memref<11x1xf32, #tpu.memory_space<vmem>>, %arg6: memref<21x11xf32, #tpu.memory_space<vmem>>, %arg7: memref<11x21xf32, #tpu.memory_space<vmem>>, %arg8: memref<1x11xf32, #tpu.memory_space<vmem>>, %arg9: memref<1x128xf32, #tpu.memory_space<vmem>>) attributes {dimension_semantics = [#tpu.dimension_semantics<parallel>], iteration_bounds = array<i64: 1>, scalar_prefetch = 0 : i64, scratch_operands = 0 : i64, tpu.core_type = #tpu.core_type<tc>, window_params = [{transform_indices = @transform_0, window_bounds = array<i64: 128, 4>}, {transform_indices = @transform_1, window_bounds = array<i64: 128, 6>}, {pipeline_mode = #tpu.pipeline_mode<synchronous>, transform_indices = @transform_2, window_bounds = array<i64: 11, 4>}, {pipeline_mode = #tpu.pipeline_mode<synchronous>, transform_indices = @transform_3, window_bounds = array<i64: 11, 6>}, {pipeline_mode = #tpu.pipeline_mode<synchronous>, transform_indices = @transform_4, window_bounds = array<i64: 11, 1>}, {pipeline_mode = #tpu.pipeline_mode<synchronous>, transform_indices = @transform_5, window_bounds = array<i64: 21, 11>}, {pipeline_mode = #tpu.pipeline_mode<synchronous>, transform_indices = @transform_6, window_bounds = array<i64: 11, 21>}, {pipeline_mode = #tpu.pipeline_mode<synchronous>, transform_indices = @transform_7, window_bounds = array<i64: 1, 11>}, {transform_indices = @transform_8, window_bounds = array<i64: 1, 128>}]} {
    %c0 = arith.constant 0 : index
    %c0_0 = arith.constant 0 : index
    %0 = vector.load %arg3[%c0, %c0_0] : memref<11x4xf32, #tpu.memory_space<vmem>>, vector<11x4xf32>
    %c0_1 = arith.constant 0 : index
    %c0_2 = arith.constant 0 : index
    %1 = vector.load %arg1[%c0_1, %c0_2] : memref<128x4xf32, #tpu.memory_space<vmem>>, vector<128x4xf32>
    %cst = arith.constant dense<0.000000e+00> : vector<11x128xf32>
    %2 = tpu.matmul %0, %1, %cst {dimension_numbers = #tpu.dot_dimension_numbers<[1], [1], [0], [0], [0, 0, 1, 0], [], []>} : vector<11x4xf32>, vector<128x4xf32>, vector<11x128xf32> -> vector<11x128xf32>
    %c0_3 = arith.constant 0 : index
    %c0_4 = arith.constant 0 : index
    %3 = vector.load %arg4[%c0_3, %c0_4] : memref<11x6xf32, #tpu.memory_space<vmem>>, vector<11x6xf32>
    %c0_5 = arith.constant 0 : index
    %c0_6 = arith.constant 0 : index
    %4 = vector.load %arg2[%c0_5, %c0_6] : memref<128x6xf32, #tpu.memory_space<vmem>>, vector<128x6xf32>
    %cst_7 = arith.constant dense<0.000000e+00> : vector<11x128xf32>
    %5 = tpu.matmul %3, %4, %cst_7 {dimension_numbers = #tpu.dot_dimension_numbers<[1], [1], [0], [0], [0, 0, 1, 0], [], []>} : vector<11x6xf32>, vector<128x6xf32>, vector<11x128xf32> -> vector<11x128xf32>
    %6 = arith.addf %2, %5 : vector<11x128xf32>
    %c0_8 = arith.constant 0 : index
    %c0_9 = arith.constant 0 : index
    %7 = vector.load %arg5[%c0_8, %c0_9] : memref<11x1xf32, #tpu.memory_space<vmem>>, vector<11x1xf32>
    %8 = vector.broadcast %7 : vector<11x1xf32> to vector<11x128xf32>
    %9 = arith.addf %6, %8 : vector<11x128xf32>
    %cst_10 = arith.constant 0.000000e+00 : f32
    %10 = vector.broadcast %cst_10 : f32 to vector<11x128xf32>
    %11 = arith.maximumf %9, %10 : vector<11x128xf32>
    %c0_11 = arith.constant 0 : index
    %c0_12 = arith.constant 0 : index
    %12 = vector.load %arg6[%c0_11, %c0_12] : memref<21x11xf32, #tpu.memory_space<vmem>>, vector<21x11xf32>
    %cst_13 = arith.constant dense<0.000000e+00> : vector<21x128xf32>
    %13 = tpu.matmul %12, %11, %cst_13 {dimension_numbers = #tpu.dot_dimension_numbers<[1], [0], [0], [1], [0, 0, 1, 1], [], []>} : vector<21x11xf32>, vector<11x128xf32>, vector<21x128xf32> -> vector<21x128xf32>
    %cst_14 = arith.constant 0.000000e+00 : f32
    %cst_15 = arith.constant 1.000000e+00 : f32
    %14 = vector.broadcast %cst_14 : f32 to vector<21x128xf32>
    %15 = arith.maximumf %14, %13 : vector<21x128xf32>
    %16 = vector.broadcast %cst_15 : f32 to vector<21x128xf32>
    %17 = arith.minimumf %16, %15 : vector<21x128xf32>
    %c0_16 = arith.constant 0 : index
    %c0_17 = arith.constant 0 : index
    %18 = vector.load %arg7[%c0_16, %c0_17] : memref<11x21xf32, #tpu.memory_space<vmem>>, vector<11x21xf32>
    %cst_18 = arith.constant dense<0.000000e+00> : vector<11x128xf32>
    %19 = tpu.matmul %18, %17, %cst_18 {dimension_numbers = #tpu.dot_dimension_numbers<[1], [0], [0], [1], [0, 0, 1, 1], [], []>} : vector<11x21xf32>, vector<21x128xf32>, vector<11x128xf32> -> vector<11x128xf32>
    %cst_19 = arith.constant 0.000000e+00 : f32
    %20 = vector.broadcast %cst_19 : f32 to vector<11x128xf32>
    %21 = arith.maximumf %19, %20 : vector<11x128xf32>
    %c0_20 = arith.constant 0 : index
    %c0_21 = arith.constant 0 : index
    %22 = vector.load %arg8[%c0_20, %c0_21] : memref<1x11xf32, #tpu.memory_space<vmem>>, vector<1x11xf32>
    %cst_22 = arith.constant dense<0.000000e+00> : vector<1x128xf32>
    %23 = tpu.matmul %22, %21, %cst_22 {dimension_numbers = #tpu.dot_dimension_numbers<[1], [0], [0], [1], [0, 0, 1, 1], [], []>} : vector<1x11xf32>, vector<11x128xf32>, vector<1x128xf32> -> vector<1x128xf32>
    %c0_23 = arith.constant 0 : index
    %c0_24 = arith.constant 0 : index
    %24 = vector.load %arg9[%c0_23, %c0_24] : memref<1x128xf32, #tpu.memory_space<vmem>>, vector<1x128xf32>
    tpu.vector_store %arg9[%c0_23, %c0_24], %23 {strides = array<i32>} : memref<1x128xf32, #tpu.memory_space<vmem>>, vector<1x128xf32>,
    return
  }
  func.func @transform_0(%arg0: i32) -> (i32, i32) {
    %c0_i32 = arith.constant 0 : i32
    %c0_i32_0 = arith.constant 0 : i32
    return %arg0, %c0_i32 : i32, i32
  }
  func.func @transform_1(%arg0: i32) -> (i32, i32) {
    %c0_i32 = arith.constant 0 : i32
    %c0_i32_0 = arith.constant 0 : i32
    return %arg0, %c0_i32 : i32, i32
  }
  func.func @transform_2(%arg0: i32) -> (i32, i32) {
    %c0_i32 = arith.constant 0 : i32
    %c0_i32_0 = arith.constant 0 : i32
    %c0_i32_1 = arith.constant 0 : i32
    return %c0_i32, %c0_i32_0 : i32, i32
  }
  func.func @transform_3(%arg0: i32) -> (i32, i32) {
    %c0_i32 = arith.constant 0 : i32
    %c0_i32_0 = arith.constant 0 : i32
    %c0_i32_1 = arith.constant 0 : i32
    return %c0_i32, %c0_i32_0 : i32, i32
  }
  func.func @transform_4(%arg0: i32) -> (i32, i32) {
    %c0_i32 = arith.constant 0 : i32
    %c0_i32_0 = arith.constant 0 : i32
    %c0_i32_1 = arith.constant 0 : i32
    return %c0_i32, %c0_i32_0 : i32, i32
  }
  func.func @transform_5(%arg0: i32) -> (i32, i32) {
    %c0_i32 = arith.constant 0 : i32
    %c0_i32_0 = arith.constant 0 : i32
    %c0_i32_1 = arith.constant 0 : i32
    return %c0_i32, %c0_i32_0 : i32, i32
  }
  func.func @transform_6(%arg0: i32) -> (i32, i32) {
    %c0_i32 = arith.constant 0 : i32
    %c0_i32_0 = arith.constant 0 : i32
    %c0_i32_1 = arith.constant 0 : i32
    return %c0_i32, %c0_i32_0 : i32, i32
  }
  func.func @transform_7(%arg0: i32) -> (i32, i32) {
    %c0_i32 = arith.constant 0 : i32
    %c0_i32_0 = arith.constant 0 : i32
    %c0_i32_1 = arith.constant 0 : i32
    return %c0_i32, %c0_i32_0 : i32, i32
  }
  func.func @transform_8(%arg0: i32) -> (i32, i32) {
    %c0_i32 = arith.constant 0 : i32
    %c0_i32_0 = arith.constant 0 : i32
    return %c0_i32, %arg0 : i32, i32
  }
}

</mosaic_0001>

<llo_original>
// kernel: tpu_custom_call.1
$region0: #{tpu_custom_call.1}
  #allocation0 [shape = 'u32[]', space=smem, size = 0x4, offset = 0x4, fixed_abs, tag = 'smem constant byte address 0x4 - core index']
  #allocation1 [shape = 'u32[144,128]{1,0:T(1,128)}', space=vmem, size = 0x12000, scoped, tag = 'internal scratch']
  %s0 = inlined_call_operand.vmem [shape: f32[128,4], index: 0, kind: input, shape index: {}]
  %s1 = inlined_call_operand.vmem [shape: f32[128,6], index: 1, kind: input, shape index: {}]
  %s2 = inlined_call_operand.vmem [shape: f32[11,4], index: 2, kind: input, shape index: {}]
  %s3 = inlined_call_operand.vmem [shape: f32[11,6], index: 3, kind: input, shape index: {}]
  %s4 = inlined_call_operand.vmem [shape: f32[11,1], index: 4, kind: input, shape index: {}]
  %s5 = inlined_call_operand.vmem [shape: f32[21,11], index: 5, kind: input, shape index: {}]
  %s6 = inlined_call_operand.vmem [shape: f32[11,21], index: 6, kind: input, shape index: {}]
  %s7 = inlined_call_operand.vmem [shape: f32[1,11], index: 7, kind: input, shape index: {}]
  %s8 = inlined_call_operand.hbm [shape: f32[1,128], index: 8, kind: output, shape index: {}]
  %s9 = sld [smem:[#allocation0]]
  $region42: #{tpu_custom_call.1} parent=0
    _
  %s11 = ssub.s32 1, %s9
  %s12 = scalar_select 0, %s11, %s9
  $region1: #{tpu_custom_call.1} parent=0
    #allocation2 [shape = 'u8[512]{0}', space=vmem, size = 0x400, scoped, tag = 'output window, operand 0, single buffered']
    #allocation3 [shape = 's32[1]{0}', space=sflag, size = 0x4, scoped, tag = 'scoped memory for tpu_custom_call.1']
    %13 = vsyncpa [#allocation3], 0
    // Predicated region
    $region2: #{tpu_custom_call.1} parent=1 // pred_check
      _
    $region3: #{tpu_custom_call.1} parent=1 // pred_check_branch
      %15 = sbr.rel (0) target = $region5
    $region4: #{tpu_custom_call.1} parent=1 // pred_region
      _
    $region5: #{tpu_custom_call.1} parent=1 // pred_fallthru
      _
    // Predicated region
    $region6: #{tpu_custom_call.1} parent=1 // pred_check
      _
    $region7: #{tpu_custom_call.1} parent=1 // pred_check_branch
      %17 = sbr.rel (0) target = $region9
    $region8: #{tpu_custom_call.1} parent=1 // pred_region
      _
    $region9: #{tpu_custom_call.1} parent=1 // pred_fallthru
      _
    // Predicated region
    $region10: #{tpu_custom_call.1} parent=1 // pred_check
      _
    $region11: #{tpu_custom_call.1} parent=1 // pred_check_branch
      %19 = sbr.rel (0) target = $region13
    $region12: #{tpu_custom_call.1} parent=1 // pred_region
      _
    $region13: #{tpu_custom_call.1} parent=1 // pred_fallthru
      _
    // Predicated region
    $region14: #{tpu_custom_call.1} parent=1 // pred_check
      _
    $region15: #{tpu_custom_call.1} parent=1 // pred_check_branch
      %21 = sbr.rel (0) target = $region17
    $region16: #{tpu_custom_call.1} parent=1 // pred_region
      _
    $region17: #{tpu_custom_call.1} parent=1 // pred_fallthru
      _
    // Predicated region
    $region18: #{tpu_custom_call.1} parent=1 // pred_check
      _
    $region19: #{tpu_custom_call.1} parent=1 // pred_check_branch
      %23 = sbr.rel (0) target = $region21
    $region20: #{tpu_custom_call.1} parent=1 // pred_region
      _
    $region21: #{tpu_custom_call.1} parent=1 // pred_fallthru
      _
    // Predicated region
    $region22: #{tpu_custom_call.1} parent=1 // pred_check
      _
    $region23: #{tpu_custom_call.1} parent=1 // pred_check_branch
      %25 = sbr.rel (0) target = $region25
    $region24: #{tpu_custom_call.1} parent=1 // pred_region
      _
    $region25: #{tpu_custom_call.1} parent=1 // pred_fallthru
      _
    // Predicated region
    $region26: #{tpu_custom_call.1} parent=1 // pred_check
      _
    $region27: #{tpu_custom_call.1} parent=1 // pred_check_branch
      %27 = sbr.rel (0) target = $region29
    $region28: #{tpu_custom_call.1} parent=1 // pred_region
      _
    $region29: #{tpu_custom_call.1} parent=1 // pred_fallthru
      _
    // Predicated region
    $region30: #{tpu_custom_call.1} parent=1 // pred_check
      _
    $region31: #{tpu_custom_call.1} parent=1 // pred_check_branch
      %29 = sbr.rel (0) target = $region33
    $region32: #{tpu_custom_call.1} parent=1 // pred_region
      _
    $region33: #{tpu_custom_call.1} parent=1 // pred_fallthru
      _
    %v30 = vld [vmem:[%s2] sm:$0xff]
    %v31 = vld [vmem:[%s2 + $0x8] sm:$0x7]
    %v32 = vld [vmem:[%s0] sm:$0xff]
    %v33 = vld [vmem:[%s0 + $0x8] sm:$0xff]
    %v34 = vld [vmem:[%s0 + $0x10] sm:$0xff]
    %v35 = vld [vmem:[%s0 + $0x18] sm:$0xff]
    %v36 = vld [vmem:[%s0 + $0x20] sm:$0xff]
    %v37 = vld [vmem:[%s0 + $0x28] sm:$0xff]
    %v38 = vld [vmem:[%s0 + $0x30] sm:$0xff]
    %v39 = vld [vmem:[%s0 + $0x38] sm:$0xff]
    %v40 = vld [vmem:[%s0 + $0x40] sm:$0xff]
    %v41 = vld [vmem:[%s0 + $0x48] sm:$0xff]
    %v42 = vld [vmem:[%s0 + $0x50] sm:$0xff]
    %v43 = vld [vmem:[%s0 + $0x58] sm:$0xff]
    %v44 = vld [vmem:[%s0 + $0x60] sm:$0xff]
    %v45 = vld [vmem:[%s0 + $0x68] sm:$0xff]
    %v46 = vld [vmem:[%s0 + $0x70] sm:$0xff]
    %v47 = vld [vmem:[%s0 + $0x78] sm:$0xff]
    %v48 = vld [vmem:[%s3] sm:$0xff]
    %v49 = vld [vmem:[%s3 + $0x8] sm:$0x7]
    %v50 = vld [vmem:[%s1] sm:$0xff]
    %v51 = vld [vmem:[%s1 + $0x8] sm:$0xff]
    %v52 = vld [vmem:[%s1 + $0x10] sm:$0xff]
    %v53 = vld [vmem:[%s1 + $0x18] sm:$0xff]
    %v54 = vld [vmem:[%s1 + $0x20] sm:$0xff]
    %v55 = vld [vmem:[%s1 + $0x28] sm:$0xff]
    %v56 = vld [vmem:[%s1 + $0x30] sm:$0xff]
    %v57 = vld [vmem:[%s1 + $0x38] sm:$0xff]
    %v58 = vld [vmem:[%s1 + $0x40] sm:$0xff]
    %v59 = vld [vmem:[%s1 + $0x48] sm:$0xff]
    %v60 = vld [vmem:[%s1 + $0x50] sm:$0xff]
    %v61 = vld [vmem:[%s1 + $0x58] sm:$0xff]
    %v62 = vld [vmem:[%s1 + $0x60] sm:$0xff]
    %v63 = vld [vmem:[%s1 + $0x68] sm:$0xff]
    %v64 = vld [vmem:[%s1 + $0x70] sm:$0xff]
    %v65 = vld [vmem:[%s1 + $0x78] sm:$0xff]
    %vm66 = vcmask 48128
    %v68 = vsel %vm66, %v48, 0
    %v71 = vsel %vm66, %v49, 0
    %v74 = vsel %vm66, %v50, 0
    %v77 = vsel %vm66, %v51, 0
    %v80 = vsel %vm66, %v52, 0
    %v83 = vsel %vm66, %v53, 0
    %v86 = vsel %vm66, %v54, 0
    %v89 = vsel %vm66, %v55, 0
    %v92 = vsel %vm66, %v56, 0
    %v95 = vsel %vm66, %v57, 0
    %v98 = vsel %vm66, %v58, 0
    %v101 = vsel %vm66, %v59, 0
    %v104 = vsel %vm66, %v60, 0
    %v107 = vsel %vm66, %v61, 0
    %v110 = vsel %vm66, %v62, 0
    %v113 = vsel %vm66, %v63, 0
    %v116 = vsel %vm66, %v64, 0
    %v119 = vsel %vm66, %v65, 0
    %121 = vmatprep.subr.mxu0 0.0
    %122 = vmatpush1.xpose.msra.mxu0 %v119
    %123 = vmatprep.subr.mxu0 0.0
    %124 = vmatpush1.xpose.msra.mxu0 %v116
    %125 = vmatprep.subr.mxu0 0.0
    %126 = vmatpush1.xpose.msra.mxu0 %v113
    %127 = vmatprep.subr.mxu0 0.0
    %128 = vmatpush1.xpose.msra.mxu0 %v110
    %129 = vmatprep.subr.mxu0 0.0
    %130 = vmatpush1.xpose.msra.mxu0 %v107
    %131 = vmatprep.subr.mxu0 0.0
    %132 = vmatpush1.xpose.msra.mxu0 %v104
    %133 = vmatprep.subr.mxu0 0.0
    %134 = vmatpush1.xpose.msra.mxu0 %v101
    %135 = vmatprep.subr.mxu0 0.0
    %136 = vmatpush1.xpose.msra.mxu0 %v98
    %137 = vmatprep.subr.mxu0 0.0
    %138 = vmatpush1.xpose.msra.mxu0 %v95
    %139 = vmatprep.subr.mxu0 0.0
    %140 = vmatpush1.xpose.msra.mxu0 %v92
    %141 = vmatprep.subr.mxu0 0.0
    %142 = vmatpush1.xpose.msra.mxu0 %v89
    %143 = vmatprep.subr.mxu0 0.0
    %144 = vmatpush1.xpose.msra.mxu0 %v86
    %145 = vmatprep.subr.mxu0 0.0
    %146 = vmatpush1.xpose.msra.mxu0 %v83
    %147 = vmatprep.subr.mxu0 0.0
    %148 = vmatpush1.xpose.msra.mxu0 %v80
    %149 = vmatprep.subr.mxu0 0.0
    %150 = vmatpush1.xpose.msra.mxu0 %v77
    %151 = vmatprep.subr.mxu0 0.0
    %152 = vmatpush1.xpose.msra.mxu0 %v74
    %153 = vmatprep.subr.mxu0 0.0
    %154 = vmatpush2.xpose.msra.mxu0 0.0
    %155 = vmatprep.subr.mxu0 0.0
    %156 = vmatpush2.xpose.msra.mxu0 0.0
    %157 = vmatprep.subr.mxu0 0.0
    %158 = vmatpush2.xpose.msra.mxu0 0.0
    %159 = vmatprep.subr.mxu0 0.0
    %160 = vmatpush2.xpose.msra.mxu0 0.0
    %161 = vmatprep.subr.mxu0 0.0
    %162 = vmatpush2.xpose.msra.mxu0 0.0
    %163 = vmatprep.subr.mxu0 0.0
    %164 = vmatpush2.xpose.msra.mxu0 0.0
    %165 = vmatprep.subr.mxu0 0.0
    %166 = vmatpush2.xpose.msra.mxu0 0.0
    %167 = vmatprep.subr.mxu0 0.0
    %168 = vmatpush2.xpose.msra.mxu0 0.0
    %169 = vmatprep.subr.mxu0 0.0
    %170 = vmatpush2.xpose.msra.mxu0 0.0
    %171 = vmatprep.subr.mxu0 0.0
    %172 = vmatpush2.xpose.msra.mxu0 0.0
    %173 = vmatprep.subr.mxu0 0.0
    %174 = vmatpush2.xpose.msra.mxu0 0.0
    %175 = vmatprep.subr.mxu0 0.0
    %176 = vmatpush2.xpose.msra.mxu0 0.0
    %177 = vmatprep.subr.mxu0 0.0
    %178 = vmatpush2.xpose.msra.mxu0 0.0
    %179 = vmatprep.subr.mxu0 0.0
    %180 = vmatpush2.xpose.msra.mxu0 0.0
    %181 = vmatprep.subr.mxu0 0.0
    %182 = vmatpush2.xpose.msra.mxu0 0.0
    %183 = vmatprep.subr.mxu0 0.0
    %184 = vmatpush2.xpose.msra.mxu0 0.0
    %185 = vmatprep.mubr.f32.mxu0 0.0
    %186 = vmatmul.mubr.f32.gmra.mxu0 %v68
    %v187 = vpop.f32.mrf.mxu0
    %v188 = vadd.f32 0.0, %v187
    %v189 = vpop.f32.mrf.mxu0
    %190 = vmatprep.mubr.f32.mxu0 0.0
    %191 = vmatmul.mubr.f32.gmra.mxu0 %v71
    %v192 = vpop.f32.mrf.mxu0
    %v193 = vadd.f32 0.0, %v192
    %v194 = vpop.f32.mrf.mxu0
    %195 = vdwg.mxu0
    %vm196 = vcmask 31744
    %v198 = vsel %vm196, %v30, 0
    %v201 = vsel %vm196, %v31, 0
    %v204 = vsel %vm196, %v32, 0
    %v207 = vsel %vm196, %v33, 0
    %v210 = vsel %vm196, %v34, 0
    %v213 = vsel %vm196, %v35, 0
    %v216 = vsel %vm196, %v36, 0
    %v219 = vsel %vm196, %v37, 0
    %v222 = vsel %vm196, %v38, 0
    %v225 = vsel %vm196, %v39, 0
    %v228 = vsel %vm196, %v40, 0
    %v231 = vsel %vm196, %v41, 0
    %v234 = vsel %vm196, %v42, 0
    %v237 = vsel %vm196, %v43, 0
    %v240 = vsel %vm196, %v44, 0
    %v243 = vsel %vm196, %v45, 0
    %v246 = vsel %vm196, %v46, 0
    %v249 = vsel %vm196, %v47, 0
    %251 = vmatprep.subr.mxu0 0.0
    %252 = vmatpush1.xpose.msra.mxu0 %v249
    %253 = vmatprep.subr.mxu0 0.0
    %254 = vmatpush1.xpose.msra.mxu0 %v246
    %255 = vmatprep.subr.mxu0 0.0
    %256 = vmatpush1.xpose.msra.mxu0 %v243
    %257 = vmatprep.subr.mxu0 0.0
    %258 = vmatpush1.xpose.msra.mxu0 %v240
    %259 = vmatprep.subr.mxu0 0.0
    %260 = vmatpush1.xpose.msra.mxu0 %v237
    %261 = vmatprep.subr.mxu0 0.0
    %262 = vmatpush1.xpose.msra.mxu0 %v234
    %263 = vmatprep.subr.mxu0 0.0
    %264 = vmatpush1.xpose.msra.mxu0 %v231
    %265 = vmatprep.subr.mxu0 0.0
    %266 = vmatpush1.xpose.msra.mxu0 %v228
    %267 = vmatprep.subr.mxu0 0.0
    %268 = vmatpush1.xpose.msra.mxu0 %v225
    %269 = vmatprep.subr.mxu0 0.0
    %270 = vmatpush1.xpose.msra.mxu0 %v222
    %271 = vmatprep.subr.mxu0 0.0
    %272 = vmatpush1.xpose.msra.mxu0 %v219
    %273 = vmatprep.subr.mxu0 0.0
    %274 = vmatpush1.xpose.msra.mxu0 %v216
    %275 = vmatprep.subr.mxu0 0.0
    %276 = vmatpush1.xpose.msra.mxu0 %v213
    %277 = vmatprep.subr.mxu0 0.0
    %278 = vmatpush1.xpose.msra.mxu0 %v210
    %279 = vmatprep.subr.mxu0 0.0
    %280 = vmatpush1.xpose.msra.mxu0 %v207
    %281 = vmatprep.subr.mxu0 0.0
    %282 = vmatpush1.xpose.msra.mxu0 %v204
    %283 = vmatprep.subr.mxu0 0.0
    %284 = vmatpush2.xpose.msra.mxu0 0.0
    %285 = vmatprep.subr.mxu0 0.0
    %286 = vmatpush2.xpose.msra.mxu0 0.0
    %287 = vmatprep.subr.mxu0 0.0
    %288 = vmatpush2.xpose.msra.mxu0 0.0
    %289 = vmatprep.subr.mxu0 0.0
    %290 = vmatpush2.xpose.msra.mxu0 0.0
    %291 = vmatprep.subr.mxu0 0.0
    %292 = vmatpush2.xpose.msra.mxu0 0.0
    %293 = vmatprep.subr.mxu0 0.0
    %294 = vmatpush2.xpose.msra.mxu0 0.0
    %295 = vmatprep.subr.mxu0 0.0
    %296 = vmatpush2.xpose.msra.mxu0 0.0
    %297 = vmatprep.subr.mxu0 0.0
    %298 = vmatpush2.xpose.msra.mxu0 0.0
    %299 = vmatprep.subr.mxu0 0.0
    %300 = vmatpush2.xpose.msra.mxu0 0.0
    %301 = vmatprep.subr.mxu0 0.0
    %302 = vmatpush2.xpose.msra.mxu0 0.0
    %303 = vmatprep.subr.mxu0 0.0
    %304 = vmatpush2.xpose.msra.mxu0 0.0
    %305 = vmatprep.subr.mxu0 0.0
    %306 = vmatpush2.xpose.msra.mxu0 0.0
    %307 = vmatprep.subr.mxu0 0.0
    %308 = vmatpush2.xpose.msra.mxu0 0.0
    %309 = vmatprep.subr.mxu0 0.0
    %310 = vmatpush2.xpose.msra.mxu0 0.0
    %311 = vmatprep.subr.mxu0 0.0
    %312 = vmatpush2.xpose.msra.mxu0 0.0
    %313 = vmatprep.subr.mxu0 0.0
    %314 = vmatpush2.xpose.msra.mxu0 0.0
    %315 = vmatprep.mubr.f32.mxu0 0.0
    %316 = vmatmul.mubr.f32.gmra.mxu0 %v198
    %v317 = vpop.f32.mrf.mxu0
    %v318 = vadd.f32 %v188, %v317
    %v319 = vpop.f32.mrf.mxu0
    %320 = vmatprep.mubr.f32.mxu0 0.0
    %321 = vmatmul.mubr.f32.gmra.mxu0 %v201
    %v322 = vpop.f32.mrf.mxu0
    %v323 = vadd.f32 %v193, %v322
    %v324 = vpop.f32.mrf.mxu0
    %325 = vdwg.mxu0
    %v326 = vld [vmem:[%s4] sm:$0xff]
    %v327 = vld [vmem:[%s4 + $0x8] sm:$0x7]
    %329 = vset.pattern.permute.xlu0 0
    %330 = vperm.xlu0 %329, %v326
    %v331 = vpop.permute.xlu0 %330
    %334 = vset.pattern.permute.xlu0 0
    %335 = vperm.xlu0 %334, %v327
    %v336 = vpop.permute.xlu0 %335
    %v338 = vadd.f32 %v318, %v331
    %v339 = vadd.f32 %v323, %v336
    %v340 = vmax.f32 %v338, 0.0
    %v341 = vmax.f32 %v339, 0.0
    %v342 = vld [vmem:[%s5] sm:$0xff]
    %v343 = vld [vmem:[%s5 + $0x8] sm:$0xff]
    %v344 = vld [vmem:[%s5 + $0x10] sm:$0x1f]
    %vm345 = vcmask 89088
    %v347 = vsel %vm345, %v342, 0
    %v350 = vsel %vm345, %v343, 0
    %v353 = vsel %vm345, %v344, 0
    %vm355 = vcmask 1042432
    %v357 = vsel %vm355, %v341, 0
    %359 = vmatprep.subr.mxu0 0.0
    %360 = vmatpush1.msra.mxu0 0.0
    %361 = vmatprep.subr.mxu0 0.0
    %362 = vmatpush1.msra.mxu0 0.0
    %363 = vmatprep.subr.mxu0 0.0
    %364 = vmatpush1.msra.mxu0 0.0
    %365 = vmatprep.subr.mxu0 0.0
    %366 = vmatpush1.msra.mxu0 0.0
    %367 = vmatprep.subr.mxu0 0.0
    %368 = vmatpush1.msra.mxu0 0.0
    %369 = vmatprep.subr.mxu0 0.0
    %370 = vmatpush1.msra.mxu0 0.0
    %371 = vmatprep.subr.mxu0 0.0
    %372 = vmatpush1.msra.mxu0 0.0
    %373 = vmatprep.subr.mxu0 0.0
    %374 = vmatpush1.msra.mxu0 0.0
    %375 = vmatprep.subr.mxu0 0.0
    %376 = vmatpush1.msra.mxu0 0.0
    %377 = vmatprep.subr.mxu0 0.0
    %378 = vmatpush1.msra.mxu0 0.0
    %379 = vmatprep.subr.mxu0 0.0
    %380 = vmatpush1.msra.mxu0 0.0
    %381 = vmatprep.subr.mxu0 0.0
    %382 = vmatpush1.msra.mxu0 0.0
    %383 = vmatprep.subr.mxu0 0.0
    %384 = vmatpush1.msra.mxu0 0.0
    %385 = vmatprep.subr.mxu0 0.0
    %386 = vmatpush1.msra.mxu0 0.0
    %387 = vmatprep.subr.mxu0 0.0
    %388 = vmatpush1.msra.mxu0 %v357
    %389 = vmatprep.subr.mxu0 0.0
    %390 = vmatpush1.msra.mxu0 %v340
    %391 = vmatprep.subr.mxu0 0.0
    %392 = vmatpush2.msra.mxu0 0.0
    %393 = vmatprep.subr.mxu0 0.0
    %394 = vmatpush2.msra.mxu0 0.0
    %395 = vmatprep.subr.mxu0 0.0
    %396 = vmatpush2.msra.mxu0 0.0
    %397 = vmatprep.subr.mxu0 0.0
    %398 = vmatpush2.msra.mxu0 0.0
    %399 = vmatprep.subr.mxu0 0.0
    %400 = vmatpush2.msra.mxu0 0.0
    %401 = vmatprep.subr.mxu0 0.0
    %402 = vmatpush2.msra.mxu0 0.0
    %403 = vmatprep.subr.mxu0 0.0
    %404 = vmatpush2.msra.mxu0 0.0
    %405 = vmatprep.subr.mxu0 0.0
    %406 = vmatpush2.msra.mxu0 0.0
    %407 = vmatprep.subr.mxu0 0.0
    %408 = vmatpush2.msra.mxu0 0.0
    %409 = vmatprep.subr.mxu0 0.0
    %410 = vmatpush2.msra.mxu0 0.0
    %411 = vmatprep.subr.mxu0 0.0
    %412 = vmatpush2.msra.mxu0 0.0
    %413 = vmatprep.subr.mxu0 0.0
    %414 = vmatpush2.msra.mxu0 0.0
    %415 = vmatprep.subr.mxu0 0.0
    %416 = vmatpush2.msra.mxu0 0.0
    %417 = vmatprep.subr.mxu0 0.0
    %418 = vmatpush2.msra.mxu0 0.0
    %419 = vmatprep.subr.mxu0 0.0
    %420 = vmatpush2.msra.mxu0 0.0
    %421 = vmatprep.subr.mxu0 0.0
    %422 = vmatpush2.msra.mxu0 0.0
    %423 = vmatprep.mubr.f32.mxu0 0.0
    %424 = vmatmul.mubr.f32.gmra.mxu0 %v347
    %v425 = vpop.f32.mrf.mxu0
    %v426 = vadd.f32 0.0, %v425
    %v427 = vpop.f32.mrf.mxu0
    %428 = vmatprep.mubr.f32.mxu0 0.0
    %429 = vmatmul.mubr.f32.gmra.mxu0 %v350
    %v430 = vpop.f32.mrf.mxu0
    %v431 = vadd.f32 0.0, %v430
    %v432 = vpop.f32.mrf.mxu0
    %433 = vmatprep.mubr.f32.mxu0 0.0
    %434 = vmatmul.mubr.f32.gmra.mxu0 %v353
    %v435 = vpop.f32.mrf.mxu0
    %v436 = vadd.f32 0.0, %v435
    %v437 = vpop.f32.mrf.mxu0
    %438 = vdwg.mxu0
    %v439 = vmax.f32 %v426, 0.0
    %v440 = vmax.f32 %v431, 0.0
    %v441 = vmax.f32 %v436, 0.0
    %v442 = vmin.f32 %v439, 1.0
    %v443 = vmin.f32 %v440, 1.0
    %v444 = vmin.f32 %v441, 1.0
    %v445 = vld [vmem:[%s6] sm:$0xff]
    %v446 = vld [vmem:[%s6 + $0x8] sm:$0x7]
    %vm447 = vcmask 171008
    %v449 = vsel %vm447, %v445, 0
    %v452 = vsel %vm447, %v446, 0
    %vm454 = vcmask 1044480
    %v456 = vsel %vm454, %v444, 0
    %458 = vmatprep.subr.mxu0 0.0
    %459 = vmatpush1.msra.mxu0 0.0
    %460 = vmatprep.subr.mxu0 0.0
    %461 = vmatpush1.msra.mxu0 0.0
    %462 = vmatprep.subr.mxu0 0.0
    %463 = vmatpush1.msra.mxu0 0.0
    %464 = vmatprep.subr.mxu0 0.0
    %465 = vmatpush1.msra.mxu0 0.0
    %466 = vmatprep.subr.mxu0 0.0
    %467 = vmatpush1.msra.mxu0 0.0
    %468 = vmatprep.subr.mxu0 0.0
    %469 = vmatpush1.msra.mxu0 0.0
    %470 = vmatprep.subr.mxu0 0.0
    %471 = vmatpush1.msra.mxu0 0.0
    %472 = vmatprep.subr.mxu0 0.0
    %473 = vmatpush1.msra.mxu0 0.0
    %474 = vmatprep.subr.mxu0 0.0
    %475 = vmatpush1.msra.mxu0 0.0
    %476 = vmatprep.subr.mxu0 0.0
    %477 = vmatpush1.msra.mxu0 0.0
    %478 = vmatprep.subr.mxu0 0.0
    %479 = vmatpush1.msra.mxu0 0.0
    %480 = vmatprep.subr.mxu0 0.0
    %481 = vmatpush1.msra.mxu0 0.0
    %482 = vmatprep.subr.mxu0 0.0
    %483 = vmatpush1.msra.mxu0 0.0
    %484 = vmatprep.subr.mxu0 0.0
    %485 = vmatpush1.msra.mxu0 %v456
    %486 = vmatprep.subr.mxu0 0.0
    %487 = vmatpush1.msra.mxu0 %v443
    %488 = vmatprep.subr.mxu0 0.0
    %489 = vmatpush1.msra.mxu0 %v442
    %490 = vmatprep.subr.mxu0 0.0
    %491 = vmatpush2.msra.mxu0 0.0
    %492 = vmatprep.subr.mxu0 0.0
    %493 = vmatpush2.msra.mxu0 0.0
    %494 = vmatprep.subr.mxu0 0.0
    %495 = vmatpush2.msra.mxu0 0.0
    %496 = vmatprep.subr.mxu0 0.0
    %497 = vmatpush2.msra.mxu0 0.0
    %498 = vmatprep.subr.mxu0 0.0
    %499 = vmatpush2.msra.mxu0 0.0
    %500 = vmatprep.subr.mxu0 0.0
    %501 = vmatpush2.msra.mxu0 0.0
    %502 = vmatprep.subr.mxu0 0.0
    %503 = vmatpush2.msra.mxu0 0.0
    %504 = vmatprep.subr.mxu0 0.0
    %505 = vmatpush2.msra.mxu0 0.0
    %506 = vmatprep.subr.mxu0 0.0
    %507 = vmatpush2.msra.mxu0 0.0
    %508 = vmatprep.subr.mxu0 0.0
    %509 = vmatpush2.msra.mxu0 0.0
    %510 = vmatprep.subr.mxu0 0.0
    %511 = vmatpush2.msra.mxu0 0.0
    %512 = vmatprep.subr.mxu0 0.0
    %513 = vmatpush2.msra.mxu0 0.0
    %514 = vmatprep.subr.mxu0 0.0
    %515 = vmatpush2.msra.mxu0 0.0
    %516 = vmatprep.subr.mxu0 0.0
    %517 = vmatpush2.msra.mxu0 0.0
    %518 = vmatprep.subr.mxu0 0.0
    %519 = vmatpush2.msra.mxu0 0.0
    %520 = vmatprep.subr.mxu0 0.0
    %521 = vmatpush2.msra.mxu0 0.0
    %522 = vmatprep.mubr.f32.mxu0 0.0
    %523 = vmatmul.mubr.f32.gmra.mxu0 %v449
    %v524 = vpop.f32.mrf.mxu0
    %v525 = vadd.f32 0.0, %v524
    %v526 = vpop.f32.mrf.mxu0
    %527 = vmatprep.mubr.f32.mxu0 0.0
    %528 = vmatmul.mubr.f32.gmra.mxu0 %v452
    %v529 = vpop.f32.mrf.mxu0
    %v530 = vadd.f32 0.0, %v529
    %v531 = vpop.f32.mrf.mxu0
    %532 = vdwg.mxu0
    %v533 = vmax.f32 %v525, 0.0
    %v534 = vmax.f32 %v530, 0.0
    %v535 = vld [vmem:[%s7] sm:$0x1]
    %v537 = vsel %vm345, %v535, 0
    %v540 = vsel %vm355, %v534, 0
    %542 = vmatprep.subr.mxu0 0.0
    %543 = vmatpush1.msra.mxu0 0.0
    %544 = vmatprep.subr.mxu0 0.0
    %545 = vmatpush1.msra.mxu0 0.0
    %546 = vmatprep.subr.mxu0 0.0
    %547 = vmatpush1.msra.mxu0 0.0
    %548 = vmatprep.subr.mxu0 0.0
    %549 = vmatpush1.msra.mxu0 0.0
    %550 = vmatprep.subr.mxu0 0.0
    %551 = vmatpush1.msra.mxu0 0.0
    %552 = vmatprep.subr.mxu0 0.0
    %553 = vmatpush1.msra.mxu0 0.0
    %554 = vmatprep.subr.mxu0 0.0
    %555 = vmatpush1.msra.mxu0 0.0
    %556 = vmatprep.subr.mxu0 0.0
    %557 = vmatpush1.msra.mxu0 0.0
    %558 = vmatprep.subr.mxu0 0.0
    %559 = vmatpush1.msra.mxu0 0.0
    %560 = vmatprep.subr.mxu0 0.0
    %561 = vmatpush1.msra.mxu0 0.0
    %562 = vmatprep.subr.mxu0 0.0
    %563 = vmatpush1.msra.mxu0 0.0
    %564 = vmatprep.subr.mxu0 0.0
    %565 = vmatpush1.msra.mxu0 0.0
    %566 = vmatprep.subr.mxu0 0.0
    %567 = vmatpush1.msra.mxu0 0.0
    %568 = vmatprep.subr.mxu0 0.0
    %569 = vmatpush1.msra.mxu0 0.0
    %570 = vmatprep.subr.mxu0 0.0
    %571 = vmatpush1.msra.mxu0 %v540
    %572 = vmatprep.subr.mxu0 0.0
    %573 = vmatpush1.msra.mxu0 %v533
    %574 = vmatprep.subr.mxu0 0.0
    %575 = vmatpush2.msra.mxu0 0.0
    %576 = vmatprep.subr.mxu0 0.0
    %577 = vmatpush2.msra.mxu0 0.0
    %578 = vmatprep.subr.mxu0 0.0
    %579 = vmatpush2.msra.mxu0 0.0
    %580 = vmatprep.subr.mxu0 0.0
    %581 = vmatpush2.msra.mxu0 0.0
    %582 = vmatprep.subr.mxu0 0.0
    %583 = vmatpush2.msra.mxu0 0.0
    %584 = vmatprep.subr.mxu0 0.0
    %585 = vmatpush2.msra.mxu0 0.0
    %586 = vmatprep.subr.mxu0 0.0
    %587 = vmatpush2.msra.mxu0 0.0
    %588 = vmatprep.subr.mxu0 0.0
    %589 = vmatpush2.msra.mxu0 0.0
    %590 = vmatprep.subr.mxu0 0.0
    %591 = vmatpush2.msra.mxu0 0.0
    %592 = vmatprep.subr.mxu0 0.0
    %593 = vmatpush2.msra.mxu0 0.0
    %594 = vmatprep.subr.mxu0 0.0
    %595 = vmatpush2.msra.mxu0 0.0
    %596 = vmatprep.subr.mxu0 0.0
    %597 = vmatpush2.msra.mxu0 0.0
    %598 = vmatprep.subr.mxu0 0.0
    %599 = vmatpush2.msra.mxu0 0.0
    %600 = vmatprep.subr.mxu0 0.0
    %601 = vmatpush2.msra.mxu0 0.0
    %602 = vmatprep.subr.mxu0 0.0
    %603 = vmatpush2.msra.mxu0 0.0
    %604 = vmatprep.subr.mxu0 0.0
    %605 = vmatpush2.msra.mxu0 0.0
    %606 = vmatprep.mubr.f32.mxu0 0.0
    %607 = vmatmul.mubr.f32.gmra.mxu0 %v537
    %v608 = vpop.f32.mrf.mxu0
    %v609 = vadd.f32 0.0, %v608
    %v610 = vpop.f32.mrf.mxu0
    %611 = vdwg.mxu0
    %612 = vst [vmem:[#allocation2] sm:$0x1] %v609
    // Predicated region
    $region34: #{tpu_custom_call.1} parent=1 // pred_check
      _
    $region35: #{tpu_custom_call.1} parent=1 // pred_check_branch
      %614 = sbr.rel (0) target = $region37
    $region36: #{tpu_custom_call.1} parent=1 // pred_region
      %s616 = ssub.s32 16, 16
      %617 = vsyncadd [#allocation3], %s616
      %s619 = sshll.u32 [#allocation2], 4
      %s620 = int_to_ptr.vmem [resolvable:$true] %s619
      %622 = dma.vmem_to_hbm [thread:$0]  %s620, 16, %s8, [#allocation3]
    $region37: #{tpu_custom_call.1} parent=1 // pred_fallthru
      _
    // Predicated region
    $region38: #{tpu_custom_call.1} parent=1 // pred_check
      _
    $region39: #{tpu_custom_call.1} parent=1 // pred_check_branch
      %624 = sbr.rel (0) target = $region41
    $region40: #{tpu_custom_call.1} parent=1 // pred_region
      %625 = dma.done [#allocation3], 16
    $region41: #{tpu_custom_call.1} parent=1 // pred_fallthru
      _
    %626 = vsyncpa [#allocation3], 1

</llo_original>
